<compile_context>
chip_gen: v6e
topology: v6e:2x2x1
jax: 0.10.0
libtpu: 0.0.40
codegen_flags: <defaults>
</compile_context>

<pallas_src>
import jax
import jax.numpy as jnp
from jax.experimental import pallas as pl
from jax.experimental.pallas import tpu as pltpu


def _decoder_kernel(latent_ref, w1_ref, b1_ref, w2_ref, b2_ref, u_ref,
                    samples_ref, logits_ref):
    # --- decoder_network: Linear -> ReLU -> Linear (Bernoulli logits) ---
    x = latent_ref[...]                                               # (TB, L) f32
    h = jnp.dot(x, w1_ref[...], preferred_element_type=jnp.float32) + b1_ref[...]
    h = jnp.maximum(h, 0.0)                                           # (TB, H)
    logits = jnp.dot(h, w2_ref[...], preferred_element_type=jnp.float32) + b2_ref[...]
    logits_ref[...] = logits.astype(logits_ref.dtype)                 # (TB, D) dist params

    # sigmoid lowers to the EUP logistic unit (idle otherwise in this phase)
    probs = jax.nn.sigmoid(logits)                                    # (TB, D)

    # --- Bernoulli sampling: u ~ U[0,1), sample = (u < p) ---
    # single broadcast compare + single unmasked lane-dense store
    u = u_ref[...]                                                    # (TB, S, D)
    samples_ref[...] = (u < probs[:, None, :]).astype(samples_ref.dtype)


def _pick_batch_tile(batch):
    # MXU-friendly tiles when batch is large; full-array block otherwise.
    for tb in (256, 128, 64, 32, 16, 8):
        if batch % tb == 0:
            return tb
    return batch


def decoder_forward(latent, params, *, n_samples=1, key=None):
    """Returns (samples[B*n_samples, D], (logits[B, D], probs[B, D]))."""
    w1, b1, w2, b2 = params
    B, L = latent.shape
    H = w1.shape[1]
    D = w2.shape[1]
    S = int(n_samples)
    if key is None:
        key = jax.random.PRNGKey(0)

    # Host-side uniforms (see TODO at top of file re: on-chip PRNG).
    u = jax.random.uniform(key, (B, S, D), dtype=jnp.float32)

    TB = _pick_batch_tile(B)
    grid = (B // TB,)
    rep2 = lambda i: (0, 0)   # weights/biases replicated across the batch grid

    samples, logits = pl.pallas_call(
        _decoder_kernel,
        out_shape=(
            jax.ShapeDtypeStruct((B, S, D), jnp.float32),   # batch-major samples
            jax.ShapeDtypeStruct((B, D), jnp.float32),      # dist logits
        ),
        grid=grid,
        in_specs=[
            pl.BlockSpec((TB, L), lambda i: (i, 0)),        # latent
            pl.BlockSpec((L, H), rep2),                     # w1
            pl.BlockSpec((1, H), rep2),                     # b1
            pl.BlockSpec((H, D), rep2),                     # w2
            pl.BlockSpec((1, D), rep2),                     # b2
            pl.BlockSpec((TB, S, D), lambda i: (i, 0, 0)),  # uniforms
        ],
        out_specs=(
            pl.BlockSpec((TB, S, D), lambda i: (i, 0, 0)),
            pl.BlockSpec((TB, D), lambda i: (i, 0)),
        ),
        compiler_params=pltpu.CompilerParams(
            dimension_semantics=("parallel",)),
    )(latent, w1, b1, w2, b2, u)

    # torch flatten(0,1): row = b * n_samples + s  ->  free reshape, no transpose.
    samples_flat = samples.reshape(B * S, D)
    probs = jax.nn.sigmoid(logits)
    return samples_flat, (logits, probs)


def _init_params(key, latent_dim, hidden_dim, out_dim):
    k1, k2, k3, k4 = jax.random.split(key, 4)
    w1 = (jax.random.normal(k1, (latent_dim, hidden_dim), jnp.float32)
          * (1.0 / jnp.sqrt(latent_dim)))
    b1 = 0.01 * jax.random.normal(k2, (1, hidden_dim), jnp.float32)
    w2 = (jax.random.normal(k3, (hidden_dim, out_dim), jnp.float32)
          * (1.0 / jnp.sqrt(hidden_dim)))
    b2 = 0.01 * jax.random.normal(k4, (1, out_dim), jnp.float32)
    return w1, b1, w2, b2


if __name__ == "__main__":
    key = jax.random.PRNGKey(0)
    k_lat, k_par, k_samp = jax.random.split(key, 3)

    B, LATENT, HIDDEN, OUT, N_SAMPLES = 8, 16, 32, 128, 4

    latent = jax.random.normal(k_lat, (B, LATENT), jnp.float32)
    params = _init_params(k_par, LATENT, HIDDEN, OUT)

    samples, (logits, probs) = decoder_forward(
        latent, params, n_samples=N_SAMPLES, key=k_samp)
    samples = jax.block_until_ready(samples)
    logits = jax.block_until_ready(logits)
    probs = jax.block_until_ready(probs)

    # shape / value checks
    assert samples.shape == (B * N_SAMPLES, OUT)
    assert logits.shape == (B, OUT)
    assert bool(jnp.all((samples == 0.0) | (samples == 1.0)))

    # logits must match the pure-JAX reference MLP
    w1, b1, w2, b2 = params
    logits_ref = jnp.maximum(latent @ w1 + b1, 0.0) @ w2 + b2
    assert bool(jnp.allclose(logits, logits_ref, atol=1e-4, rtol=1e-4))
    assert bool(jnp.allclose(probs, jax.nn.sigmoid(logits_ref), atol=1e-5))

    print("KERNEL_OK")
</pallas_src>

<mosaic_0001>
module attributes {stable_mosaic.version = 11 : i64} {
  func.func @_decoder_kernel(%arg0: i32, %arg1: memref<8x16xf32, #tpu.memory_space<vmem>>, %arg2: memref<16x32xf32, #tpu.memory_space<vmem>>, %arg3: memref<1x32xf32, #tpu.memory_space<vmem>>, %arg4: memref<32x128xf32, #tpu.memory_space<vmem>>, %arg5: memref<1x128xf32, #tpu.memory_space<vmem>>, %arg6: memref<8x4x128xf32, #tpu.memory_space<vmem>>, %arg7: memref<8x4x128xf32, #tpu.memory_space<vmem>>, %arg8: memref<8x128xf32, #tpu.memory_space<vmem>>) attributes {dimension_semantics = [#tpu.dimension_semantics<parallel>], iteration_bounds = array<i64: 1>, scalar_prefetch = 0 : i64, scratch_operands = 0 : i64, tpu.core_type = #tpu.core_type<tc>, window_params = [{transform_indices = @transform_0, window_bounds = array<i64: 8, 16>}, {pipeline_mode = #tpu.pipeline_mode<synchronous>, transform_indices = @transform_1, window_bounds = array<i64: 16, 32>}, {pipeline_mode = #tpu.pipeline_mode<synchronous>, transform_indices = @transform_2, window_bounds = array<i64: 1, 32>}, {pipeline_mode = #tpu.pipeline_mode<synchronous>, transform_indices = @transform_3, window_bounds = array<i64: 32, 128>}, {pipeline_mode = #tpu.pipeline_mode<synchronous>, transform_indices = @transform_4, window_bounds = array<i64: 1, 128>}, {transform_indices = @transform_5, window_bounds = array<i64: 8, 4, 128>}, {transform_indices = @transform_6, window_bounds = array<i64: 8, 4, 128>}, {transform_indices = @transform_7, window_bounds = array<i64: 8, 128>}]} {
    %c0 = arith.constant 0 : index
    %c0_0 = arith.constant 0 : index
    %0 = vector.load %arg1[%c0, %c0_0] : memref<8x16xf32, #tpu.memory_space<vmem>>, vector<8x16xf32>
    %c0_1 = arith.constant 0 : index
    %c0_2 = arith.constant 0 : index
    %1 = vector.load %arg2[%c0_1, %c0_2] : memref<16x32xf32, #tpu.memory_space<vmem>>, vector<16x32xf32>
    %cst = arith.constant dense<0.000000e+00> : vector<8x32xf32>
    %2 = tpu.matmul %0, %1, %cst {dimension_numbers = #tpu.dot_dimension_numbers<[1], [0], [0], [1], [0, 0, 1, 1], [], []>} : vector<8x16xf32>, vector<16x32xf32>, vector<8x32xf32> -> vector<8x32xf32>
    %c0_3 = arith.constant 0 : index
    %c0_4 = arith.constant 0 : index
    %3 = vector.load %arg3[%c0_3, %c0_4] : memref<1x32xf32, #tpu.memory_space<vmem>>, vector<1x32xf32>
    %4 = vector.broadcast %3 : vector<1x32xf32> to vector<8x32xf32>
    %5 = arith.addf %2, %4 : vector<8x32xf32>
    %cst_5 = arith.constant 0.000000e+00 : f32
    %6 = vector.broadcast %cst_5 : f32 to vector<8x32xf32>
    %7 = arith.maximumf %5, %6 : vector<8x32xf32>
    %c0_6 = arith.constant 0 : index
    %c0_7 = arith.constant 0 : index
    %8 = vector.load %arg4[%c0_6, %c0_7] : memref<32x128xf32, #tpu.memory_space<vmem>>, vector<32x128xf32>
    %cst_8 = arith.constant dense<0.000000e+00> : vector<8x128xf32>
    %9 = tpu.matmul %7, %8, %cst_8 {dimension_numbers = #tpu.dot_dimension_numbers<[1], [0], [0], [1], [0, 0, 1, 1], [], []>} : vector<8x32xf32>, vector<32x128xf32>, vector<8x128xf32> -> vector<8x128xf32>
    %c0_9 = arith.constant 0 : index
    %c0_10 = arith.constant 0 : index
    %10 = vector.load %arg5[%c0_9, %c0_10] : memref<1x128xf32, #tpu.memory_space<vmem>>, vector<1x128xf32>
    %11 = vector.broadcast %10 : vector<1x128xf32> to vector<8x128xf32>
    %12 = arith.addf %9, %11 : vector<8x128xf32>
    %c0_11 = arith.constant 0 : index
    %c0_12 = arith.constant 0 : index
    %13 = vector.load %arg8[%c0_11, %c0_12] : memref<8x128xf32, #tpu.memory_space<vmem>>, vector<8x128xf32>
    tpu.vector_store %arg8[%c0_11, %c0_12], %12 {strides = array<i32>} : memref<8x128xf32, #tpu.memory_space<vmem>>, vector<8x128xf32>,
    %14 = arith.negf %12 : vector<8x128xf32>
    %15 = math.exp %14 : vector<8x128xf32>
    %cst_13 = arith.constant 1.000000e+00 : f32
    %16 = vector.broadcast %cst_13 : f32 to vector<8x128xf32>
    %17 = arith.addf %16, %15 : vector<8x128xf32>
    %18 = arith.divf %16, %17 : vector<8x128xf32>
    %c0_14 = arith.constant 0 : index
    %c0_15 = arith.constant 0 : index
    %c0_16 = arith.constant 0 : index
    %19 = vector.load %arg6[%c0_14, %c0_15, %c0_16] : memref<8x4x128xf32, #tpu.memory_space<vmem>>, vector<8x4x128xf32>
    %20 = vector.shape_cast %18 : vector<8x128xf32> to vector<8x1x128xf32>
    %21 = vector.broadcast %20 : vector<8x1x128xf32> to vector<8x4x128xf32>
    %22 = arith.cmpf olt, %19, %21 : vector<8x4x128xf32>
    %23 = arith.extui %22 : vector<8x4x128xi1> to vector<8x4x128xi32>
    %24 = arith.sitofp %23 : vector<8x4x128xi32> to vector<8x4x128xf32>
    %c0_17 = arith.constant 0 : index
    %c0_18 = arith.constant 0 : index
    %c0_19 = arith.constant 0 : index
    %25 = vector.load %arg7[%c0_17, %c0_18, %c0_19] : memref<8x4x128xf32, #tpu.memory_space<vmem>>, vector<8x4x128xf32>
    tpu.vector_store %arg7[%c0_17, %c0_18, %c0_19], %24 {strides = array<i32>} : memref<8x4x128xf32, #tpu.memory_space<vmem>>, vector<8x4x128xf32>,
    return
  }
  func.func @transform_0(%arg0: i32) -> (i32, i32) {
    %c0_i32 = arith.constant 0 : i32
    %c0_i32_0 = arith.constant 0 : i32
    return %arg0, %c0_i32 : i32, i32
  }
  func.func @transform_1(%arg0: i32) -> (i32, i32) {
    %c0_i32 = arith.constant 0 : i32
    %c0_i32_0 = arith.constant 0 : i32
    %c0_i32_1 = arith.constant 0 : i32
    return %c0_i32, %c0_i32_0 : i32, i32
  }
  func.func @transform_2(%arg0: i32) -> (i32, i32) {
    %c0_i32 = arith.constant 0 : i32
    %c0_i32_0 = arith.constant 0 : i32
    %c0_i32_1 = arith.constant 0 : i32
    return %c0_i32, %c0_i32_0 : i32, i32
  }
  func.func @transform_3(%arg0: i32) -> (i32, i32) {
    %c0_i32 = arith.constant 0 : i32
    %c0_i32_0 = arith.constant 0 : i32
    %c0_i32_1 = arith.constant 0 : i32
    return %c0_i32, %c0_i32_0 : i32, i32
  }
  func.func @transform_4(%arg0: i32) -> (i32, i32) {
    %c0_i32 = arith.constant 0 : i32
    %c0_i32_0 = arith.constant 0 : i32
    %c0_i32_1 = arith.constant 0 : i32
    return %c0_i32, %c0_i32_0 : i32, i32
  }
  func.func @transform_5(%arg0: i32) -> (i32, i32, i32) {
    %c0_i32 = arith.constant 0 : i32
    %c0_i32_0 = arith.constant 0 : i32
    %c0_i32_1 = arith.constant 0 : i32
    return %arg0, %c0_i32, %c0_i32_0 : i32, i32, i32
  }
  func.func @transform_6(%arg0: i32) -> (i32, i32, i32) {
    %c0_i32 = arith.constant 0 : i32
    %c0_i32_0 = arith.constant 0 : i32
    %c0_i32_1 = arith.constant 0 : i32
    return %arg0, %c0_i32, %c0_i32_0 : i32, i32, i32
  }
  func.func @transform_7(%arg0: i32) -> (i32, i32) {
    %c0_i32 = arith.constant 0 : i32
    %c0_i32_0 = arith.constant 0 : i32
    return %arg0, %c0_i32 : i32, i32
  }
}

</mosaic_0001>

<llo_original>
// kernel: tpu_custom_call.1
$region0: #{tpu_custom_call.1}
  #allocation0 [shape = 'u32[]', space=smem, size = 0x4, offset = 0x4, fixed_abs, tag = 'smem constant byte address 0x4 - core index']
  #allocation1 [shape = 'u32[144,128]{1,0:T(1,128)}', space=vmem, size = 0x12000, scoped, tag = 'internal scratch']
  %s0 = inlined_call_operand.hbm [shape: f32[8,16], index: 0, kind: input, shape index: {}]
  %s1 = inlined_call_operand.hbm [shape: f32[16,32], index: 1, kind: input, shape index: {}]
  %s2 = inlined_call_operand.vmem [shape: f32[1,32], index: 2, kind: input, shape index: {}]
  %s3 = inlined_call_operand.hbm [shape: f32[32,128], index: 3, kind: input, shape index: {}]
  %s4 = inlined_call_operand.vmem [shape: f32[1,128], index: 4, kind: input, shape index: {}]
  %s5 = inlined_call_operand.hbm [shape: f32[8,4,128], index: 5, kind: input, shape index: {}]
  %s6 = inlined_call_operand.hbm [shape: f32[8,4,128], index: 6, kind: output, shape index: {0}]
  %s7 = inlined_call_operand.hbm [shape: f32[8,128], index: 7, kind: output, shape index: {1}]
  %8 = xla_tuple %s6, %s7
  %s9 = sld [smem:[#allocation0]]
  $region58: #{tpu_custom_call.1} parent=0
    _
  %s11 = ssub.s32 1, %s9
  %s12 = scalar_select 0, %s11, %s9
  $region1: #{tpu_custom_call.1} parent=0
    #allocation2 [shape = 'u8[4096]{0}', space=vmem, size = 0x1000, scoped, tag = 'input window, operand 0, single buffered']
    #allocation3 [shape = 's32[1]{0}', space=sflag, size = 0x4, scoped, tag = 'scoped memory for tpu_custom_call.1']
    #allocation4 [shape = 's32[1]{0}', space=sflag, size = 0x4, scoped, tag = 'scoped memory for tpu_custom_call.1']
    #allocation5 [shape = 'u8[8192]{0}', space=vmem, size = 0x2000, scoped, tag = 'input window, operand 1, single buffered']
    #allocation6 [shape = 's32[1]{0}', space=sflag, size = 0x4, scoped, tag = 'scoped memory for tpu_custom_call.1']
    #allocation7 [shape = 'u8[16384]{0}', space=vmem, size = 0x4000, scoped, tag = 'input window, operand 3, single buffered']
    #allocation8 [shape = 'u8[16384]{0}', space=vmem, size = 0x4000, scoped, tag = 'input window, operand 5, single buffered']
    #allocation9 [shape = 's32[1]{0}', space=sflag, size = 0x4, scoped, tag = 'scoped memory for tpu_custom_call.1']
    #allocation10 [shape = 'u8[16384]{0}', space=vmem, size = 0x4000, scoped, tag = 'output window, operand 0, single buffered']
    #allocation11 [shape = 'u8[4096]{0}', space=vmem, size = 0x1000, scoped, tag = 'output window, operand 1, single buffered']
    #allocation12 [shape = 's32[1]{0}', space=sflag, size = 0x4, scoped, tag = 'scoped memory for tpu_custom_call.1']
    %13 = vsyncpa [#allocation3], 0
    %14 = vsyncpa [#allocation6], 0
    %15 = vsyncpa [#allocation9], 0
    %16 = vsyncpa [#allocation4], 0
    %17 = vsyncpa [#allocation12], 0
    // Predicated region
    $region2: #{tpu_custom_call.1} parent=1 // pred_check
      _
    $region3: #{tpu_custom_call.1} parent=1 // pred_check_branch
      %19 = sbr.rel (0) target = $region5
    $region4: #{tpu_custom_call.1} parent=1 // pred_region
      %s21 = ssub.s32 128, 128
      %22 = vsyncadd [#allocation3], %s21
      %s24 = sshll.u32 [#allocation2], 4
      %s25 = int_to_ptr.vmem [resolvable:$true] %s24
      %27 = dma.hbm_to_vmem [thread:$0]  %s0, 128, %s25, [#allocation3]
    $region5: #{tpu_custom_call.1} parent=1 // pred_fallthru
      _
    // Predicated region
    $region6: #{tpu_custom_call.1} parent=1 // pred_check
      _
    $region7: #{tpu_custom_call.1} parent=1 // pred_check_branch
      %29 = sbr.rel (0) target = $region9
    $region8: #{tpu_custom_call.1} parent=1 // pred_region
      %s31 = ssub.s32 256, 256
      %32 = vsyncadd [#allocation6], %s31
      %s33 = sshll.u32 [#allocation5], 4
      %s34 = int_to_ptr.vmem [resolvable:$true] %s33
      %39 = dma.hbm_to_vmem [thread:$0]  %s1, 256, %s34, [#allocation6], 128, 128, 8
    $region9: #{tpu_custom_call.1} parent=1 // pred_fallthru
      _
    // Predicated region
    $region10: #{tpu_custom_call.1} parent=1 // pred_check
      _
    $region11: #{tpu_custom_call.1} parent=1 // pred_check_branch
      %41 = sbr.rel (0) target = $region13
    $region12: #{tpu_custom_call.1} parent=1 // pred_region
      _
    $region13: #{tpu_custom_call.1} parent=1 // pred_fallthru
      _
    // Predicated region
    $region14: #{tpu_custom_call.1} parent=1 // pred_check
      _
    $region15: #{tpu_custom_call.1} parent=1 // pred_check_branch
      %43 = sbr.rel (0) target = $region17
    $region16: #{tpu_custom_call.1} parent=1 // pred_region
      %s45 = ssub.s32 512, 512
      %46 = vsyncadd [#allocation6], %s45
      %s47 = sshll.u32 [#allocation7], 4
      %s48 = int_to_ptr.vmem [resolvable:$true] %s47
      %53 = dma.hbm_to_vmem [thread:$0]  %s3, 512, %s48, [#allocation6], 128, 128, 8
    $region17: #{tpu_custom_call.1} parent=1 // pred_fallthru
      _
    // Predicated region
    $region18: #{tpu_custom_call.1} parent=1 // pred_check
      _
    $region19: #{tpu_custom_call.1} parent=1 // pred_check_branch
      %55 = sbr.rel (0) target = $region21
    $region20: #{tpu_custom_call.1} parent=1 // pred_region
      _
    $region21: #{tpu_custom_call.1} parent=1 // pred_fallthru
      _
    // Predicated region
    $region22: #{tpu_custom_call.1} parent=1 // pred_check
      _
    $region23: #{tpu_custom_call.1} parent=1 // pred_check_branch
      %57 = sbr.rel (0) target = $region25
    $region24: #{tpu_custom_call.1} parent=1 // pred_region
      %s59 = ssub.s32 512, 512
      %60 = vsyncadd [#allocation9], %s59
      %s61 = sshll.u32 [#allocation8], 4
      %s62 = int_to_ptr.vmem [resolvable:$true] %s61
      %67 = dma.hbm_to_vmem [thread:$0]  %s5, 512, %s62, [#allocation9], 64, 64, 4
    $region25: #{tpu_custom_call.1} parent=1 // pred_fallthru
      _
    // Predicated region
    $region26: #{tpu_custom_call.1} parent=1 // pred_check
      _
    $region27: #{tpu_custom_call.1} parent=1 // pred_check_branch
      %69 = sbr.rel (0) target = $region29
    $region28: #{tpu_custom_call.1} parent=1 // pred_region
      %70 = dma.done [#allocation3], 128
    $region29: #{tpu_custom_call.1} parent=1 // pred_fallthru
      _
    // Predicated region
    $region30: #{tpu_custom_call.1} parent=1 // pred_check
      _
    $region31: #{tpu_custom_call.1} parent=1 // pred_check_branch
      %72 = sbr.rel (0) target = $region33
    $region32: #{tpu_custom_call.1} parent=1 // pred_region
      %73 = dma.done [#allocation6], 256
    $region33: #{tpu_custom_call.1} parent=1 // pred_fallthru
      _
    // Predicated region
    $region34: #{tpu_custom_call.1} parent=1 // pred_check
      _
    $region35: #{tpu_custom_call.1} parent=1 // pred_check_branch
      %75 = sbr.rel (0) target = $region37
    $region36: #{tpu_custom_call.1} parent=1 // pred_region
      %76 = dma.done [#allocation6], 512
    $region37: #{tpu_custom_call.1} parent=1 // pred_fallthru
      _
    // Predicated region
    $region38: #{tpu_custom_call.1} parent=1 // pred_check
      _
    $region39: #{tpu_custom_call.1} parent=1 // pred_check_branch
      %78 = sbr.rel (0) target = $region41
    $region40: #{tpu_custom_call.1} parent=1 // pred_region
      %79 = dma.done [#allocation9], 512
    $region41: #{tpu_custom_call.1} parent=1 // pred_fallthru
      _
    %v80 = vld [vmem:[#allocation2] sm:$0xff]
    %v81 = vld [vmem:[#allocation5] sm:$0xff]
    %v82 = vld [vmem:[#allocation5 + $0x8] sm:$0xff]
    %v83 = vld [vmem:[%s2] sm:$0x1]
    %v85 = vlaneseq
    %v86 = vshrl.u32 %v85, 7
    %v87 = vsub.s32 0, %v86
    %v88 = vrot.slane %v83, %v87
    %vm90 = vcmask 130048
    %v92 = vsel %vm90, %v80, 0
    %94 = vmatprep.subr.mxu0 0.0
    %95 = vmatpush1.msra.mxu0 0.0
    %96 = vmatprep.subr.mxu0 0.0
    %97 = vmatpush1.msra.mxu0 0.0
    %98 = vmatprep.subr.mxu0 0.0
    %99 = vmatpush1.msra.mxu0 0.0
    %100 = vmatprep.subr.mxu0 0.0
    %101 = vmatpush1.msra.mxu0 0.0
    %102 = vmatprep.subr.mxu0 0.0
    %103 = vmatpush1.msra.mxu0 0.0
    %104 = vmatprep.subr.mxu0 0.0
    %105 = vmatpush1.msra.mxu0 0.0
    %106 = vmatprep.subr.mxu0 0.0
    %107 = vmatpush1.msra.mxu0 0.0
    %108 = vmatprep.subr.mxu0 0.0
    %109 = vmatpush1.msra.mxu0 0.0
    %110 = vmatprep.subr.mxu0 0.0
    %111 = vmatpush1.msra.mxu0 0.0
    %112 = vmatprep.subr.mxu0 0.0
    %113 = vmatpush1.msra.mxu0 0.0
    %114 = vmatprep.subr.mxu0 0.0
    %115 = vmatpush1.msra.mxu0 0.0
    %116 = vmatprep.subr.mxu0 0.0
    %117 = vmatpush1.msra.mxu0 0.0
    %118 = vmatprep.subr.mxu0 0.0
    %119 = vmatpush1.msra.mxu0 0.0
    %120 = vmatprep.subr.mxu0 0.0
    %121 = vmatpush1.msra.mxu0 0.0
    %122 = vmatprep.subr.mxu0 0.0
    %123 = vmatpush1.msra.mxu0 %v82
    %124 = vmatprep.subr.mxu0 0.0
    %125 = vmatpush1.msra.mxu0 %v81
    %126 = vmatprep.subr.mxu0 0.0
    %127 = vmatpush2.msra.mxu0 0.0
    %128 = vmatprep.subr.mxu0 0.0
    %129 = vmatpush2.msra.mxu0 0.0
    %130 = vmatprep.subr.mxu0 0.0
    %131 = vmatpush2.msra.mxu0 0.0
    %132 = vmatprep.subr.mxu0 0.0
    %133 = vmatpush2.msra.mxu0 0.0
    %134 = vmatprep.subr.mxu0 0.0
    %135 = vmatpush2.msra.mxu0 0.0
    %136 = vmatprep.subr.mxu0 0.0
    %137 = vmatpush2.msra.mxu0 0.0
    %138 = vmatprep.subr.mxu0 0.0
    %139 = vmatpush2.msra.mxu0 0.0
    %140 = vmatprep.subr.mxu0 0.0
    %141 = vmatpush2.msra.mxu0 0.0
    %142 = vmatprep.subr.mxu0 0.0
    %143 = vmatpush2.msra.mxu0 0.0
    %144 = vmatprep.subr.mxu0 0.0
    %145 = vmatpush2.msra.mxu0 0.0
    %146 = vmatprep.subr.mxu0 0.0
    %147 = vmatpush2.msra.mxu0 0.0
    %148 = vmatprep.subr.mxu0 0.0
    %149 = vmatpush2.msra.mxu0 0.0
    %150 = vmatprep.subr.mxu0 0.0
    %151 = vmatpush2.msra.mxu0 0.0
    %152 = vmatprep.subr.mxu0 0.0
    %153 = vmatpush2.msra.mxu0 0.0
    %154 = vmatprep.subr.mxu0 0.0
    %155 = vmatpush2.msra.mxu0 0.0
    %156 = vmatprep.subr.mxu0 0.0
    %157 = vmatpush2.msra.mxu0 0.0
    %158 = vmatprep.mubr.f32.mxu0 0.0
    %159 = vmatmul.mubr.f32.gmra.mxu0 %v92
    %v160 = vpop.f32.mrf.mxu0
    %v161 = vadd.f32 %v88, %v160
    %v162 = vpop.f32.mrf.mxu0
    %163 = vdwg.mxu0
    %v164 = vmax.f32 %v161, 0.0
    %v165 = vld [vmem:[#allocation7] sm:$0xff]
    %v166 = vld [vmem:[#allocation7 + $0x8] sm:$0xff]
    %v167 = vld [vmem:[#allocation7 + $0x10] sm:$0xff]
    %v168 = vld [vmem:[#allocation7 + $0x18] sm:$0xff]
    %v169 = vld [vmem:[%s4] sm:$0x1]
    %v171 = vlaneseq
    %v172 = vshrl.u32 %v171, 7
    %v173 = vsub.s32 0, %v172
    %v174 = vrot.slane %v169, %v173
    %vm176 = vcmask 261120
    %v178 = vsel %vm176, %v164, 0
    %180 = vmatprep.subr.mxu0 0.0
    %181 = vmatpush1.msra.mxu0 0.0
    %182 = vmatprep.subr.mxu0 0.0
    %183 = vmatpush1.msra.mxu0 0.0
    %184 = vmatprep.subr.mxu0 0.0
    %185 = vmatpush1.msra.mxu0 0.0
    %186 = vmatprep.subr.mxu0 0.0
    %187 = vmatpush1.msra.mxu0 0.0
    %188 = vmatprep.subr.mxu0 0.0
    %189 = vmatpush1.msra.mxu0 0.0
    %190 = vmatprep.subr.mxu0 0.0
    %191 = vmatpush1.msra.mxu0 0.0
    %192 = vmatprep.subr.mxu0 0.0
    %193 = vmatpush1.msra.mxu0 0.0
    %194 = vmatprep.subr.mxu0 0.0
    %195 = vmatpush1.msra.mxu0 0.0
    %196 = vmatprep.subr.mxu0 0.0
    %197 = vmatpush1.msra.mxu0 0.0
    %198 = vmatprep.subr.mxu0 0.0
    %199 = vmatpush1.msra.mxu0 0.0
    %200 = vmatprep.subr.mxu0 0.0
    %201 = vmatpush1.msra.mxu0 0.0
    %202 = vmatprep.subr.mxu0 0.0
    %203 = vmatpush1.msra.mxu0 0.0
    %204 = vmatprep.subr.mxu0 0.0
    %205 = vmatpush1.msra.mxu0 %v168
    %206 = vmatprep.subr.mxu0 0.0
    %207 = vmatpush1.msra.mxu0 %v167
    %208 = vmatprep.subr.mxu0 0.0
    %209 = vmatpush1.msra.mxu0 %v166
    %210 = vmatprep.subr.mxu0 0.0
    %211 = vmatpush1.msra.mxu0 %v165
    %212 = vmatprep.subr.mxu0 0.0
    %213 = vmatpush2.msra.mxu0 0.0
    %214 = vmatprep.subr.mxu0 0.0
    %215 = vmatpush2.msra.mxu0 0.0
    %216 = vmatprep.subr.mxu0 0.0
    %217 = vmatpush2.msra.mxu0 0.0
    %218 = vmatprep.subr.mxu0 0.0
    %219 = vmatpush2.msra.mxu0 0.0
    %220 = vmatprep.subr.mxu0 0.0
    %221 = vmatpush2.msra.mxu0 0.0
    %222 = vmatprep.subr.mxu0 0.0
    %223 = vmatpush2.msra.mxu0 0.0
    %224 = vmatprep.subr.mxu0 0.0
    %225 = vmatpush2.msra.mxu0 0.0
    %226 = vmatprep.subr.mxu0 0.0
    %227 = vmatpush2.msra.mxu0 0.0
    %228 = vmatprep.subr.mxu0 0.0
    %229 = vmatpush2.msra.mxu0 0.0
    %230 = vmatprep.subr.mxu0 0.0
    %231 = vmatpush2.msra.mxu0 0.0
    %232 = vmatprep.subr.mxu0 0.0
    %233 = vmatpush2.msra.mxu0 0.0
    %234 = vmatprep.subr.mxu0 0.0
    %235 = vmatpush2.msra.mxu0 0.0
    %236 = vmatprep.subr.mxu0 0.0
    %237 = vmatpush2.msra.mxu0 0.0
    %238 = vmatprep.subr.mxu0 0.0
    %239 = vmatpush2.msra.mxu0 0.0
    %240 = vmatprep.subr.mxu0 0.0
    %241 = vmatpush2.msra.mxu0 0.0
    %242 = vmatprep.subr.mxu0 0.0
    %243 = vmatpush2.msra.mxu0 0.0
    %244 = vmatprep.mubr.f32.mxu0 0.0
    %245 = vmatmul.mubr.f32.gmra.mxu0 %v178
    %v246 = vpop.f32.mrf.mxu0
    %v247 = vadd.f32 %v174, %v246
    %v248 = vpop.f32.mrf.mxu0
    %249 = vdwg.mxu0
    %250 = vst [vmem:[#allocation11] sm:$0xff] %v247
    %v251 = vxor.u32 %v247, 2147483648
    %v252 = vmul.f32 %v251, 1.442695
    %v253 = vpow.pop %v252
    %v254 = vadd.f32 %v253, 1.0
    %v255 = vrcp.pop %v254
    %v256 = vmul.f32 1.0, %v255
    %v257 = vld [vmem:[#allocation8] sm:$0xf]
    %v258 = vld [vmem:[#allocation8 + $0x4] sm:$0xf]
    %v259 = vld [vmem:[#allocation8 + $0x8] sm:$0xf]
    %v260 = vld [vmem:[#allocation8 + $0xc] sm:$0xf]
    %v261 = vld [vmem:[#allocation8 + $0x10] sm:$0xf]
    %v262 = vld [vmem:[#allocation8 + $0x14] sm:$0xf]
    %v263 = vld [vmem:[#allocation8 + $0x18] sm:$0xf]
    %v264 = vld [vmem:[#allocation8 + $0x1c] sm:$0xf]
    %v266 = vcombine.high %v256, %v256
    %v268 = vunpack.c.l.s4 1966171168
    %v269 = vunpack.c.0.s8 %v268
    %v270 = vlaneseq
    %v271 = vshrl.u32 %v270, 7
    %v272 = vsub.s32 %v269, %v271
    %v273 = vrot.slane %v256, %v272
    %v275 = vunpack.c.l.s4 1966171168
    %v276 = vunpack.c.0.s8 %v275
    %v277 = vlaneseq
    %v278 = vshrl.u32 %v277, 7
    %v279 = vsub.s32 %v276, %v278
    %v280 = vrot.slane %v266, %v279
    %v281 = vcombine.high %v273, %v273
    %v282 = vcombine.high %v280, %v280
    %v284 = vunpack.c.l.s4 1966171168
    %v285 = vunpack.c.0.s8 %v284
    %v286 = vlaneseq
    %v287 = vshrl.u32 %v286, 7
    %v288 = vsub.s32 %v285, %v287
    %v289 = vrot.slane %v273, %v288
    %v291 = vunpack.c.l.s4 1966171168
    %v292 = vunpack.c.0.s8 %v291
    %v293 = vlaneseq
    %v294 = vshrl.u32 %v293, 7
    %v295 = vsub.s32 %v292, %v294
    %v296 = vrot.slane %v280, %v295
    %v298 = vunpack.c.l.s4 1966171168
    %v299 = vunpack.c.0.s8 %v298
    %v300 = vlaneseq
    %v301 = vshrl.u32 %v300, 7
    %v302 = vsub.s32 %v299, %v301
    %v303 = vrot.slane %v281, %v302
    %v305 = vunpack.c.l.s4 1966171168
    %v306 = vunpack.c.0.s8 %v305
    %v307 = vlaneseq
    %v308 = vshrl.u32 %v307, 7
    %v309 = vsub.s32 %v306, %v308
    %v310 = vrot.slane %v282, %v309
    %v311 = vcombine.high %v289, %v289
    %v312 = vcombine.high %v296, %v296
    %v313 = vcombine.high %v303, %v303
    %v314 = vcombine.high %v310, %v310
    %v315 = vlaneseq
    %v316 = vshrl.u32 %v315, 7
    %v317 = vsub.s32 0, %v316
    %v318 = vrot.slane %v289, %v317
    %v319 = vlaneseq
    %v320 = vshrl.u32 %v319, 7
    %v321 = vsub.s32 0, %v320
    %v322 = vrot.slane %v303, %v321
    %v323 = vlaneseq
    %v324 = vshrl.u32 %v323, 7
    %v325 = vsub.s32 0, %v324
    %v326 = vrot.slane %v311, %v325
    %v327 = vlaneseq
    %v328 = vshrl.u32 %v327, 7
    %v329 = vsub.s32 0, %v328
    %v330 = vrot.slane %v313, %v329
    %v331 = vlaneseq
    %v332 = vshrl.u32 %v331, 7
    %v333 = vsub.s32 0, %v332
    %v334 = vrot.slane %v296, %v333
    %v335 = vlaneseq
    %v336 = vshrl.u32 %v335, 7
    %v337 = vsub.s32 0, %v336
    %v338 = vrot.slane %v310, %v337
    %v339 = vlaneseq
    %v340 = vshrl.u32 %v339, 7
    %v341 = vsub.s32 0, %v340
    %v342 = vrot.slane %v312, %v341
    %v343 = vlaneseq
    %v344 = vshrl.u32 %v343, 7
    %v345 = vsub.s32 0, %v344
    %v346 = vrot.slane %v314, %v345
    %vm355 = vcmp.lt.f32.partialorder %v257, %v318
    %vm356 = vcmp.lt.f32.partialorder %v258, %v322
    %vm357 = vcmp.lt.f32.partialorder %v259, %v326
    %vm358 = vcmp.lt.f32.partialorder %v260, %v330
    %vm359 = vcmp.lt.f32.partialorder %v261, %v334
    %vm360 = vcmp.lt.f32.partialorder %v262, %v338
    %vm361 = vcmp.lt.f32.partialorder %v263, %v342
    %vm362 = vcmp.lt.f32.partialorder %v264, %v346
    %v363 = vsel %vm355, 1, 0
    %v364 = vsel %vm356, 1, 0
    %v365 = vsel %vm357, 1, 0
    %v366 = vsel %vm358, 1, 0
    %v367 = vsel %vm359, 1, 0
    %v368 = vsel %vm360, 1, 0
    %v369 = vsel %vm361, 1, 0
    %v370 = vsel %vm362, 1, 0
    %v371 = vcvt.s32.f32 %v363
    %v372 = vcvt.s32.f32 %v364
    %v373 = vcvt.s32.f32 %v365
    %v374 = vcvt.s32.f32 %v366
    %v375 = vcvt.s32.f32 %v367
    %v376 = vcvt.s32.f32 %v368
    %v377 = vcvt.s32.f32 %v369
    %v378 = vcvt.s32.f32 %v370
    %379 = vst [vmem:[#allocation10] sm:$0xf] %v371
    %380 = vst [vmem:[#allocation10 + $0x4] sm:$0xf] %v372
    %381 = vst [vmem:[#allocation10 + $0x8] sm:$0xf] %v373
    %382 = vst [vmem:[#allocation10 + $0xc] sm:$0xf] %v374
    %383 = vst [vmem:[#allocation10 + $0x10] sm:$0xf] %v375
    %384 = vst [vmem:[#allocation10 + $0x14] sm:$0xf] %v376
    %385 = vst [vmem:[#allocation10 + $0x18] sm:$0xf] %v377
    %386 = vst [vmem:[#allocation10 + $0x1c] sm:$0xf] %v378
    // Predicated region
    $region42: #{tpu_custom_call.1} parent=1 // pred_check
      _
    $region43: #{tpu_custom_call.1} parent=1 // pred_check_branch
      %388 = sbr.rel (0) target = $region45
    $region44: #{tpu_custom_call.1} parent=1 // pred_region
      %s390 = ssub.s32 512, 512
      %391 = vsyncadd [#allocation4], %s390
      %s392 = sshll.u32 [#allocation10], 4
      %s393 = int_to_ptr.vmem [resolvable:$true] %s392
      %398 = dma.vmem_to_hbm [thread:$0]  %s393, 512, %s6, [#allocation4], 64, 64, 4
    $region45: #{tpu_custom_call.1} parent=1 // pred_fallthru
      _
    // Predicated region
    $region46: #{tpu_custom_call.1} parent=1 // pred_check
      _
    $region47: #{tpu_custom_call.1} parent=1 // pred_check_branch
      %400 = sbr.rel (0) target = $region49
    $region48: #{tpu_custom_call.1} parent=1 // pred_region
      %s402 = ssub.s32 128, 128
      %403 = vsyncadd [#allocation12], %s402
      %s405 = sshll.u32 [#allocation11], 4
      %s406 = int_to_ptr.vmem [resolvable:$true] %s405
      %408 = dma.vmem_to_hbm [thread:$0]  %s406, 128, %s7, [#allocation12]
    $region49: #{tpu_custom_call.1} parent=1 // pred_fallthru
      _
    // Predicated region
    $region50: #{tpu_custom_call.1} parent=1 // pred_check
      _
    $region51: #{tpu_custom_call.1} parent=1 // pred_check_branch
      %410 = sbr.rel (0) target = $region53
    $region52: #{tpu_custom_call.1} parent=1 // pred_region
      %411 = dma.done [#allocation4], 512
    $region53: #{tpu_custom_call.1} parent=1 // pred_fallthru
      _
    // Predicated region
    $region54: #{tpu_custom_call.1} parent=1 // pred_check
      _
    $region55: #{tpu_custom_call.1} parent=1 // pred_check_branch
      %413 = sbr.rel (0) target = $region57
    $region56: #{tpu_custom_call.1} parent=1 // pred_region
      %414 = dma.done [#allocation12], 128
    $region57: #{tpu_custom_call.1} parent=1 // pred_fallthru
      _
    %415 = vsyncpa [#allocation3], 1
    %416 = vsyncpa [#allocation6], 1
    %417 = vsyncpa [#allocation9], 1
    %418 = vsyncpa [#allocation4], 1
    %419 = vsyncpa [#allocation12], 1

</llo_original>
